<compile_context>
chip_gen: v7x
topology: tpu7x:2x2x1
jax: 0.10.0
libtpu: 0.0.40
codegen_flags: <defaults>
</compile_context>

<pallas_src>
import jax
import jax.numpy as jnp
from jax.experimental import pallas as pl
from jax.experimental.pallas import tpu as pltpu


def _gcn_kernel(x_ref, a_ref, b1_ref, w2_ref, o_ref):
    # x_ref : (S, G*N)     activations for one batch group, lane index = (b, n)
    # a_ref : (G*N, G*N)   kron(I_G, W1.T - I_N)  -> conv1 weight with the
    #                      residual subtraction folded in (resident)
    # b1_ref: (1, G*N)     conv1 bias tiled across the batch group (resident)
    # w2_ref: (S, S)       conv2 weight (resident)
    # o_ref : (S, G*N)     lane-dense output slab, single store
    h = jnp.dot(x_ref[...], a_ref[...],
                preferred_element_type=jnp.float32) + b1_ref[...]
    out = jnp.dot(w2_ref[...], h, preferred_element_type=jnp.float32)
    o_ref[...] = jnp.maximum(out, 0.0).astype(o_ref.dtype)


def gcn_prepare_params(w1, b1, w2, *, batch_group):
    """One-time parameter prep (kept out of the per-call forward path).

    w1: (N, N) = conv1.weight[:, :, 0]
    b1: (N,)   = conv1.bias
    w2: (S, S) = conv2.weight[:, :, 0]
    """
    n = w1.shape[0]
    a = w1.T - jnp.eye(n, dtype=w1.dtype)                         # fold `h - x`
    a_blk = jnp.kron(jnp.eye(batch_group, dtype=w1.dtype), a)     # (G*N, G*N)
    b1_tiled = jnp.tile(jnp.reshape(b1, (1, n)), (1, batch_group))  # (1, G*N)
    return a_blk, b1_tiled, w2


def gcn_forward(x, a_blk, b1_tiled, w2):
    """x: (B, S, N) f32.  Returns (B, S, N), matching the PyTorch GCN.forward."""
    B, S, N = x.shape
    GN = a_blk.shape[0]
    G = GN // N
    assert G * N == GN and B % G == 0
    # Keep every lane block BlockSpec-legal / unmasked: either one grid step
    # covers the whole batch, or each lane block is a multiple of 128 wide.
    assert G == B or GN % 128 == 0

    # Layout plumbing (outside the kernel, free-ish XLA ops):
    #   X[s, b*N + n] = x[b, s, n]  -> the large combined axis sits on lanes.
    x_lane = jnp.transpose(x, (1, 0, 2)).reshape(S, B * N)

    flops = 2 * B * S * N * GN + 2 * B * S * S * N + 2 * B * S * N
    bytes_accessed = 4 * (2 * B * S * N + GN * GN + GN + S * S)

    out_lane = pl.pallas_call(
        _gcn_kernel,
        grid=(B // G,),
        in_specs=[
            pl.BlockSpec((S, GN), lambda j: (0, j)),    # x: one batch group / step
            pl.BlockSpec((GN, GN), lambda j: (0, 0)),   # A_blk: resident across steps
            pl.BlockSpec((1, GN), lambda j: (0, 0)),    # bias: resident
            pl.BlockSpec((S, S), lambda j: (0, 0)),     # W2: resident
        ],
        out_specs=pl.BlockSpec((S, GN), lambda j: (0, j)),
        out_shape=jax.ShapeDtypeStruct((S, B * N), x.dtype),
        compiler_params=pltpu.CompilerParams(
            dimension_semantics=("parallel",)),         # batch groups shard on v7x
        cost_estimate=pl.CostEstimate(
            flops=flops, transcendentals=0, bytes_accessed=bytes_accessed),
    )(x_lane, a_blk, b1_tiled, w2)

    # Undo the layout plumbing: (S, B*N) -> (B, S, N).
    return jnp.transpose(out_lane.reshape(S, B, N), (1, 0, 2))


def gcn_reference(x, w1, b1, w2):
    # Pure-JAX reference matching the PyTorch module exactly.
    h1 = jnp.einsum("bsm,nm->bsn", x, w1) + b1[None, None, :]   # conv1 + bias
    h2 = h1 - x
    out = jnp.einsum("st,btn->bsn", w2, h2)                     # conv2, no bias
    return jnp.maximum(out, 0.0)


if __name__ == "__main__":
    B, S, N = 2, 32, 16   # batch, num_state, num_node

    key = jax.random.PRNGKey(0)
    kx, kw1, kb1, kw2 = jax.random.split(key, 4)

    x = jax.random.normal(kx, (B, S, N), dtype=jnp.float32)
    # Deterministic synthetic parameters (shapes from nn.Conv1d with k=1).
    w1 = jax.random.normal(kw1, (N, N), dtype=jnp.float32) * 0.1   # conv1.weight[:, :, 0]
    b1 = jax.random.normal(kb1, (N,), dtype=jnp.float32) * 0.1     # conv1.bias
    w2 = jax.random.normal(kw2, (S, S), dtype=jnp.float32) * 0.1   # conv2.weight[:, :, 0]

    # One-time parameter prep, then the Pallas forward.
    a_blk, b1_tiled, w2p = gcn_prepare_params(w1, b1, w2, batch_group=B)
    out = gcn_forward(x, a_blk, b1_tiled, w2p)
    out = jax.block_until_ready(out)

    ref = gcn_reference(x, w1, b1, w2)
    assert out.shape == (B, S, N)
    assert jnp.allclose(out, ref, atol=1e-4, rtol=1e-4), float(jnp.max(jnp.abs(out - ref)))

    print("KERNEL_OK")
</pallas_src>

<mosaic_0001>
module attributes {stable_mosaic.version = 11 : i64} {
  func.func @_gcn_kernel(%arg0: i32, %arg1: memref<32x32xf32, #tpu.memory_space<vmem>>, %arg2: memref<32x32xf32, #tpu.memory_space<vmem>>, %arg3: memref<1x32xf32, #tpu.memory_space<vmem>>, %arg4: memref<32x32xf32, #tpu.memory_space<vmem>>, %arg5: memref<32x32xf32, #tpu.memory_space<vmem>>) attributes {dimension_semantics = [#tpu.dimension_semantics<parallel>], iteration_bounds = array<i64: 1>, scalar_prefetch = 0 : i64, scratch_operands = 0 : i64, tpu.core_type = #tpu.core_type<tc>, window_params = [{transform_indices = @transform_0, window_bounds = array<i64: 32, 32>}, {pipeline_mode = #tpu.pipeline_mode<synchronous>, transform_indices = @transform_1, window_bounds = array<i64: 32, 32>}, {pipeline_mode = #tpu.pipeline_mode<synchronous>, transform_indices = @transform_2, window_bounds = array<i64: 1, 32>}, {pipeline_mode = #tpu.pipeline_mode<synchronous>, transform_indices = @transform_3, window_bounds = array<i64: 32, 32>}, {transform_indices = @transform_4, window_bounds = array<i64: 32, 32>}]} {
    %c0 = arith.constant 0 : index
    %c0_0 = arith.constant 0 : index
    %0 = vector.load %arg1[%c0, %c0_0] : memref<32x32xf32, #tpu.memory_space<vmem>>, vector<32x32xf32>
    %c0_1 = arith.constant 0 : index
    %c0_2 = arith.constant 0 : index
    %1 = vector.load %arg2[%c0_1, %c0_2] : memref<32x32xf32, #tpu.memory_space<vmem>>, vector<32x32xf32>
    %cst = arith.constant dense<0.000000e+00> : vector<32x32xf32>
    %2 = tpu.matmul %0, %1, %cst {dimension_numbers = #tpu.dot_dimension_numbers<[1], [0], [0], [1], [0, 0, 1, 1], [], []>} : vector<32x32xf32>, vector<32x32xf32>, vector<32x32xf32> -> vector<32x32xf32>
    %c0_3 = arith.constant 0 : index
    %c0_4 = arith.constant 0 : index
    %3 = vector.load %arg3[%c0_3, %c0_4] : memref<1x32xf32, #tpu.memory_space<vmem>>, vector<1x32xf32>
    %4 = vector.broadcast %3 : vector<1x32xf32> to vector<32x32xf32>
    %5 = arith.addf %2, %4 : vector<32x32xf32>
    %c0_5 = arith.constant 0 : index
    %c0_6 = arith.constant 0 : index
    %6 = vector.load %arg4[%c0_5, %c0_6] : memref<32x32xf32, #tpu.memory_space<vmem>>, vector<32x32xf32>
    %cst_7 = arith.constant dense<0.000000e+00> : vector<32x32xf32>
    %7 = tpu.matmul %6, %5, %cst_7 {dimension_numbers = #tpu.dot_dimension_numbers<[1], [0], [0], [1], [0, 0, 1, 1], [], []>} : vector<32x32xf32>, vector<32x32xf32>, vector<32x32xf32> -> vector<32x32xf32>
    %cst_8 = arith.constant 0.000000e+00 : f32
    %8 = vector.broadcast %cst_8 : f32 to vector<32x32xf32>
    %9 = arith.maximumf %7, %8 : vector<32x32xf32>
    %c0_9 = arith.constant 0 : index
    %c0_10 = arith.constant 0 : index
    %10 = vector.load %arg5[%c0_9, %c0_10] : memref<32x32xf32, #tpu.memory_space<vmem>>, vector<32x32xf32>
    tpu.vector_store %arg5[%c0_9, %c0_10], %9 {strides = array<i32>} : memref<32x32xf32, #tpu.memory_space<vmem>>, vector<32x32xf32>,
    return
  }
  func.func @transform_0(%arg0: i32) -> (i32, i32) {
    %c0_i32 = arith.constant 0 : i32
    %c0_i32_0 = arith.constant 0 : i32
    return %c0_i32, %arg0 : i32, i32
  }
  func.func @transform_1(%arg0: i32) -> (i32, i32) {
    %c0_i32 = arith.constant 0 : i32
    %c0_i32_0 = arith.constant 0 : i32
    %c0_i32_1 = arith.constant 0 : i32
    return %c0_i32, %c0_i32_0 : i32, i32
  }
  func.func @transform_2(%arg0: i32) -> (i32, i32) {
    %c0_i32 = arith.constant 0 : i32
    %c0_i32_0 = arith.constant 0 : i32
    %c0_i32_1 = arith.constant 0 : i32
    return %c0_i32, %c0_i32_0 : i32, i32
  }
  func.func @transform_3(%arg0: i32) -> (i32, i32) {
    %c0_i32 = arith.constant 0 : i32
    %c0_i32_0 = arith.constant 0 : i32
    %c0_i32_1 = arith.constant 0 : i32
    return %c0_i32, %c0_i32_0 : i32, i32
  }
  func.func @transform_4(%arg0: i32) -> (i32, i32) {
    %c0_i32 = arith.constant 0 : i32
    %c0_i32_0 = arith.constant 0 : i32
    return %c0_i32, %arg0 : i32, i32
  }
}

</mosaic_0001>

<llo_original>
// kernel: tpu_custom_call.1
$region0: #{tpu_custom_call.1}
  #allocation0 [shape = 'u32[]', space=smem, size = 0x4, offset = 0x4, fixed_abs, tag = 'smem constant byte address 0x4 - core index']
  #allocation1 [shape = 'u32[144,128]{1,0:T(1,128)}', space=vmem, size = 0x12000, scoped, tag = 'internal scratch']
  %s0 = inlined_call_operand.hbm [shape: f32[32,32], index: 0, kind: input, shape index: {}]
  %s1 = inlined_call_operand.hbm [shape: f32[32,32], index: 1, kind: input, shape index: {}]
  %s2 = inlined_call_operand.vmem [shape: f32[1,32], index: 2, kind: input, shape index: {}]
  %s3 = inlined_call_operand.hbm [shape: f32[32,32], index: 3, kind: input, shape index: {}]
  %s4 = inlined_call_operand.hbm [shape: f32[32,32], index: 4, kind: output, shape index: {}]
  %s5 = sld [smem:[#allocation0]]
  $region38: #{tpu_custom_call.1} parent=0
    _
  %s7 = ssub.s32 1, %s5
  %s8 = scalar_select 0, %s7, %s5
  $region1: #{tpu_custom_call.1} parent=0
    #allocation2 [shape = 'u8[16384]{0}', space=vmem, size = 0x4000, scoped, tag = 'input window, operand 0, single buffered']
    #allocation3 [shape = 's32[1]{0}', space=sflag, size = 0x4, scoped, tag = 'scoped memory for tpu_custom_call.1']
    #allocation4 [shape = 's32[1]{0}', space=sflag, size = 0x4, scoped, tag = 'scoped memory for tpu_custom_call.1']
    #allocation5 [shape = 'u8[16384]{0}', space=vmem, size = 0x4000, scoped, tag = 'input window, operand 1, single buffered']
    #allocation6 [shape = 's32[1]{0}', space=sflag, size = 0x4, scoped, tag = 'scoped memory for tpu_custom_call.1']
    #allocation7 [shape = 'u8[16384]{0}', space=vmem, size = 0x4000, scoped, tag = 'input window, operand 3, single buffered']
    #allocation8 [shape = 'u8[16384]{0}', space=vmem, size = 0x4000, scoped, tag = 'output window, operand 0, single buffered']
    %9 = vsyncpa [#allocation3], 0
    %10 = vsyncpa [#allocation6], 0
    %11 = vsyncpa [#allocation4], 0
    // Predicated region
    $region2: #{tpu_custom_call.1} parent=1 // pred_check
      _
    $region3: #{tpu_custom_call.1} parent=1 // pred_check_branch
      %13 = sbr.rel (0) target = $region5
    $region4: #{tpu_custom_call.1} parent=1 // pred_region
      %s15 = ssub.s32 512, 512
      %16 = vsyncadd [#allocation3], %s15
      %s17 = sshll.u32 [#allocation2], 4
      %s18 = int_to_ptr.vmem [resolvable:$true] %s17
      %23 = dma.hbm_to_vmem [thread:$0]  %s0, 512, %s18, [#allocation3], 128, 128, 8
    $region5: #{tpu_custom_call.1} parent=1 // pred_fallthru
      _
    // Predicated region
    $region6: #{tpu_custom_call.1} parent=1 // pred_check
      _
    $region7: #{tpu_custom_call.1} parent=1 // pred_check_branch
      %25 = sbr.rel (0) target = $region9
    $region8: #{tpu_custom_call.1} parent=1 // pred_region
      %s27 = ssub.s32 512, 512
      %28 = vsyncadd [#allocation6], %s27
      %s29 = sshll.u32 [#allocation5], 4
      %s30 = int_to_ptr.vmem [resolvable:$true] %s29
      %35 = dma.hbm_to_vmem [thread:$0]  %s1, 512, %s30, [#allocation6], 128, 128, 8
    $region9: #{tpu_custom_call.1} parent=1 // pred_fallthru
      _
    // Predicated region
    $region10: #{tpu_custom_call.1} parent=1 // pred_check
      _
    $region11: #{tpu_custom_call.1} parent=1 // pred_check_branch
      %37 = sbr.rel (0) target = $region13
    $region12: #{tpu_custom_call.1} parent=1 // pred_region
      _
    $region13: #{tpu_custom_call.1} parent=1 // pred_fallthru
      _
    // Predicated region
    $region14: #{tpu_custom_call.1} parent=1 // pred_check
      _
    $region15: #{tpu_custom_call.1} parent=1 // pred_check_branch
      %39 = sbr.rel (0) target = $region17
    $region16: #{tpu_custom_call.1} parent=1 // pred_region
      %s41 = ssub.s32 512, 512
      %42 = vsyncadd [#allocation6], %s41
      %s43 = sshll.u32 [#allocation7], 4
      %s44 = int_to_ptr.vmem [resolvable:$true] %s43
      %49 = dma.hbm_to_vmem [thread:$0]  %s3, 512, %s44, [#allocation6], 128, 128, 8
    $region17: #{tpu_custom_call.1} parent=1 // pred_fallthru
      _
    // Predicated region
    $region18: #{tpu_custom_call.1} parent=1 // pred_check
      _
    $region19: #{tpu_custom_call.1} parent=1 // pred_check_branch
      %51 = sbr.rel (0) target = $region21
    $region20: #{tpu_custom_call.1} parent=1 // pred_region
      %52 = dma.done [#allocation3], 512
    $region21: #{tpu_custom_call.1} parent=1 // pred_fallthru
      _
    // Predicated region
    $region22: #{tpu_custom_call.1} parent=1 // pred_check
      _
    $region23: #{tpu_custom_call.1} parent=1 // pred_check_branch
      %54 = sbr.rel (0) target = $region25
    $region24: #{tpu_custom_call.1} parent=1 // pred_region
      %55 = dma.done [#allocation6], 512
    $region25: #{tpu_custom_call.1} parent=1 // pred_fallthru
      _
    // Predicated region
    $region26: #{tpu_custom_call.1} parent=1 // pred_check
      _
    $region27: #{tpu_custom_call.1} parent=1 // pred_check_branch
      %57 = sbr.rel (0) target = $region29
    $region28: #{tpu_custom_call.1} parent=1 // pred_region
      %58 = dma.done [#allocation6], 512
    $region29: #{tpu_custom_call.1} parent=1 // pred_fallthru
      _
    %v59 = vld [vmem:[#allocation2] sm:$0xff]
    %v60 = vld [vmem:[#allocation2 + $0x8] sm:$0xff]
    %v61 = vld [vmem:[#allocation2 + $0x10] sm:$0xff]
    %v62 = vld [vmem:[#allocation2 + $0x18] sm:$0xff]
    %v63 = vld [vmem:[#allocation5] sm:$0xff]
    %v64 = vld [vmem:[#allocation5 + $0x8] sm:$0xff]
    %v65 = vld [vmem:[#allocation5 + $0x10] sm:$0xff]
    %v66 = vld [vmem:[#allocation5 + $0x18] sm:$0xff]
    %v67 = vld [vmem:[%s2] sm:$0x1]
    %v69 = vlaneseq
    %v70 = vshrl.u32 %v69, 7
    %v71 = vsub.s32 0, %v70
    %v72 = vrot.slane %v67, %v71
    %vm74 = vcmask 261120
    %v76 = vsel %vm74, %v59, 0
    %v79 = vsel %vm74, %v60, 0
    %v82 = vsel %vm74, %v61, 0
    %v85 = vsel %vm74, %v62, 0
    %87 = vmatprep.subr.mxu0 0.0
    %88 = vmatpush1.msra.mxu0 %v63
    %89 = vmatprep.subr.mxu0 0.0
    %90 = vmatpush1.msra.mxu0 %v64
    %91 = vmatprep.subr.mxu0 0.0
    %92 = vmatpush1.msra.mxu0 %v65
    %93 = vmatprep.subr.mxu0 0.0
    %94 = vmatpush1.msra.mxu0 %v66
    %95 = vmatprep.subr.mxu0 0.0
    %96 = vmatpush1.msra.mxu0 0.0
    %97 = vmatprep.subr.mxu0 0.0
    %98 = vmatpush1.msra.mxu0 0.0
    %99 = vmatprep.subr.mxu0 0.0
    %100 = vmatpush1.msra.mxu0 0.0
    %101 = vmatprep.subr.mxu0 0.0
    %102 = vmatpush1.msra.mxu0 0.0
    %103 = vmatprep.subr.mxu0 0.0
    %104 = vmatpush1.msra.mxu0 0.0
    %105 = vmatprep.subr.mxu0 0.0
    %106 = vmatpush1.msra.mxu0 0.0
    %107 = vmatprep.subr.mxu0 0.0
    %108 = vmatpush1.msra.mxu0 0.0
    %109 = vmatprep.subr.mxu0 0.0
    %110 = vmatpush1.msra.mxu0 0.0
    %111 = vmatprep.subr.mxu0 0.0
    %112 = vmatpush1.msra.mxu0 0.0
    %113 = vmatprep.subr.mxu0 0.0
    %114 = vmatpush1.msra.mxu0 0.0
    %115 = vmatprep.subr.mxu0 0.0
    %116 = vmatpush1.msra.mxu0 0.0
    %117 = vmatprep.subr.mxu0 0.0
    %118 = vmatpush1.msra.mxu0 0.0
    %119 = vmatprep.subr.mxu0 0.0
    %120 = vmatpush1.msra.mxu0 0.0
    %121 = vmatprep.subr.mxu0 0.0
    %122 = vmatpush1.msra.mxu0 0.0
    %123 = vmatprep.subr.mxu0 0.0
    %124 = vmatpush1.msra.mxu0 0.0
    %125 = vmatprep.subr.mxu0 0.0
    %126 = vmatpush1.msra.mxu0 0.0
    %127 = vmatprep.subr.mxu0 0.0
    %128 = vmatpush1.msra.mxu0 0.0
    %129 = vmatprep.subr.mxu0 0.0
    %130 = vmatpush1.msra.mxu0 0.0
    %131 = vmatprep.subr.mxu0 0.0
    %132 = vmatpush1.msra.mxu0 0.0
    %133 = vmatprep.subr.mxu0 0.0
    %134 = vmatpush1.msra.mxu0 0.0
    %135 = vmatprep.subr.mxu0 0.0
    %136 = vmatpush1.msra.mxu0 0.0
    %137 = vmatprep.subr.mxu0 0.0
    %138 = vmatpush1.msra.mxu0 0.0
    %139 = vmatprep.subr.mxu0 0.0
    %140 = vmatpush1.msra.mxu0 0.0
    %141 = vmatprep.subr.mxu0 0.0
    %142 = vmatpush1.msra.mxu0 0.0
    %143 = vmatprep.subr.mxu0 0.0
    %144 = vmatpush1.msra.mxu0 0.0
    %145 = vmatprep.subr.mxu0 0.0
    %146 = vmatpush1.msra.mxu0 0.0
    %147 = vmatprep.subr.mxu0 0.0
    %148 = vmatpush1.msra.mxu0 0.0
    %149 = vmatprep.subr.mxu0 0.0
    %150 = vmatpush1.msra.mxu0 0.0
    %151 = vmatprep.mubr.f32.mxu0 0.0
    %152 = vmatmul.mubr.f32.gmra.mrb[0].mxu0 %v76
    %v153 = vpop.f32.mrb[0].mxu0
    %v154 = vadd.f32 %v72, %v153
    %v155 = vpop.f32.mrb[0].mxu0
    %156 = vmatprep.mubr.f32.mxu0 0.0
    %157 = vmatmul.mubr.f32.gmra.mrb[0].mxu0 %v79
    %v158 = vpop.f32.mrb[0].mxu0
    %v159 = vadd.f32 %v72, %v158
    %v160 = vpop.f32.mrb[0].mxu0
    %161 = vmatprep.mubr.f32.mxu0 0.0
    %162 = vmatmul.mubr.f32.gmra.mrb[0].mxu0 %v82
    %v163 = vpop.f32.mrb[0].mxu0
    %v164 = vadd.f32 %v72, %v163
    %v165 = vpop.f32.mrb[0].mxu0
    %166 = vmatprep.mubr.f32.mxu0 0.0
    %167 = vmatmul.mubr.f32.gmra.mrb[0].mxu0 %v85
    %v168 = vpop.f32.mrb[0].mxu0
    %v169 = vadd.f32 %v72, %v168
    %v170 = vpop.f32.mrb[0].mxu0
    %171 = vdwg.mxu0
    %v172 = vld [vmem:[#allocation7] sm:$0xff]
    %v173 = vld [vmem:[#allocation7 + $0x8] sm:$0xff]
    %v174 = vld [vmem:[#allocation7 + $0x10] sm:$0xff]
    %v175 = vld [vmem:[#allocation7 + $0x18] sm:$0xff]
    %v177 = vsel %vm74, %v172, 0
    %v180 = vsel %vm74, %v173, 0
    %v183 = vsel %vm74, %v174, 0
    %v186 = vsel %vm74, %v175, 0
    %188 = vmatprep.subr.mxu0 0.0
    %189 = vmatpush1.msra.mxu0 %v154
    %190 = vmatprep.subr.mxu0 0.0
    %191 = vmatpush1.msra.mxu0 %v159
    %192 = vmatprep.subr.mxu0 0.0
    %193 = vmatpush1.msra.mxu0 %v164
    %194 = vmatprep.subr.mxu0 0.0
    %195 = vmatpush1.msra.mxu0 %v169
    %196 = vmatprep.subr.mxu0 0.0
    %197 = vmatpush1.msra.mxu0 0.0
    %198 = vmatprep.subr.mxu0 0.0
    %199 = vmatpush1.msra.mxu0 0.0
    %200 = vmatprep.subr.mxu0 0.0
    %201 = vmatpush1.msra.mxu0 0.0
    %202 = vmatprep.subr.mxu0 0.0
    %203 = vmatpush1.msra.mxu0 0.0
    %204 = vmatprep.subr.mxu0 0.0
    %205 = vmatpush1.msra.mxu0 0.0
    %206 = vmatprep.subr.mxu0 0.0
    %207 = vmatpush1.msra.mxu0 0.0
    %208 = vmatprep.subr.mxu0 0.0
    %209 = vmatpush1.msra.mxu0 0.0
    %210 = vmatprep.subr.mxu0 0.0
    %211 = vmatpush1.msra.mxu0 0.0
    %212 = vmatprep.subr.mxu0 0.0
    %213 = vmatpush1.msra.mxu0 0.0
    %214 = vmatprep.subr.mxu0 0.0
    %215 = vmatpush1.msra.mxu0 0.0
    %216 = vmatprep.subr.mxu0 0.0
    %217 = vmatpush1.msra.mxu0 0.0
    %218 = vmatprep.subr.mxu0 0.0
    %219 = vmatpush1.msra.mxu0 0.0
    %220 = vmatprep.subr.mxu0 0.0
    %221 = vmatpush1.msra.mxu0 0.0
    %222 = vmatprep.subr.mxu0 0.0
    %223 = vmatpush1.msra.mxu0 0.0
    %224 = vmatprep.subr.mxu0 0.0
    %225 = vmatpush1.msra.mxu0 0.0
    %226 = vmatprep.subr.mxu0 0.0
    %227 = vmatpush1.msra.mxu0 0.0
    %228 = vmatprep.subr.mxu0 0.0
    %229 = vmatpush1.msra.mxu0 0.0
    %230 = vmatprep.subr.mxu0 0.0
    %231 = vmatpush1.msra.mxu0 0.0
    %232 = vmatprep.subr.mxu0 0.0
    %233 = vmatpush1.msra.mxu0 0.0
    %234 = vmatprep.subr.mxu0 0.0
    %235 = vmatpush1.msra.mxu0 0.0
    %236 = vmatprep.subr.mxu0 0.0
    %237 = vmatpush1.msra.mxu0 0.0
    %238 = vmatprep.subr.mxu0 0.0
    %239 = vmatpush1.msra.mxu0 0.0
    %240 = vmatprep.subr.mxu0 0.0
    %241 = vmatpush1.msra.mxu0 0.0
    %242 = vmatprep.subr.mxu0 0.0
    %243 = vmatpush1.msra.mxu0 0.0
    %244 = vmatprep.subr.mxu0 0.0
    %245 = vmatpush1.msra.mxu0 0.0
    %246 = vmatprep.subr.mxu0 0.0
    %247 = vmatpush1.msra.mxu0 0.0
    %248 = vmatprep.subr.mxu0 0.0
    %249 = vmatpush1.msra.mxu0 0.0
    %250 = vmatprep.subr.mxu0 0.0
    %251 = vmatpush1.msra.mxu0 0.0
    %252 = vmatprep.mubr.f32.mxu0 0.0
    %253 = vmatmul.mubr.f32.gmra.mrb[0].mxu0 %v177
    %v254 = vpop.f32.mrb[0].mxu0
    %v255 = vadd.f32 0.0, %v254
    %v256 = vpop.f32.mrb[0].mxu0
    %257 = vmatprep.mubr.f32.mxu0 0.0
    %258 = vmatmul.mubr.f32.gmra.mrb[0].mxu0 %v180
    %v259 = vpop.f32.mrb[0].mxu0
    %v260 = vadd.f32 0.0, %v259
    %v261 = vpop.f32.mrb[0].mxu0
    %262 = vmatprep.mubr.f32.mxu0 0.0
    %263 = vmatmul.mubr.f32.gmra.mrb[0].mxu0 %v183
    %v264 = vpop.f32.mrb[0].mxu0
    %v265 = vadd.f32 0.0, %v264
    %v266 = vpop.f32.mrb[0].mxu0
    %267 = vmatprep.mubr.f32.mxu0 0.0
    %268 = vmatmul.mubr.f32.gmra.mrb[0].mxu0 %v186
    %v269 = vpop.f32.mrb[0].mxu0
    %v270 = vadd.f32 0.0, %v269
    %v271 = vpop.f32.mrb[0].mxu0
    %272 = vdwg.mxu0
    %v273 = vmax.f32 %v255, 0.0
    %v274 = vmax.f32 %v260, 0.0
    %v275 = vmax.f32 %v265, 0.0
    %v276 = vmax.f32 %v270, 0.0
    %277 = vst.msk [vmem:[#allocation8] sm:$0xff] %vm74, %v273
    %278 = vst.msk [vmem:[#allocation8 + $0x8] sm:$0xff] %vm74, %v274
    %279 = vst.msk [vmem:[#allocation8 + $0x10] sm:$0xff] %vm74, %v275
    %280 = vst.msk [vmem:[#allocation8 + $0x18] sm:$0xff] %vm74, %v276
    // Predicated region
    $region30: #{tpu_custom_call.1} parent=1 // pred_check
      _
    $region31: #{tpu_custom_call.1} parent=1 // pred_check_branch
      %282 = sbr.rel (0) target = $region33
    $region32: #{tpu_custom_call.1} parent=1 // pred_region
      %s284 = ssub.s32 512, 512
      %285 = vsyncadd [#allocation4], %s284
      %s286 = sshll.u32 [#allocation8], 4
      %s287 = int_to_ptr.vmem [resolvable:$true] %s286
      %292 = dma.vmem_to_hbm [thread:$0]  %s287, 512, %s4, [#allocation4], 128, 128, 8
    $region33: #{tpu_custom_call.1} parent=1 // pred_fallthru
      _
    // Predicated region
    $region34: #{tpu_custom_call.1} parent=1 // pred_check
      _
    $region35: #{tpu_custom_call.1} parent=1 // pred_check_branch
      %294 = sbr.rel (0) target = $region37
    $region36: #{tpu_custom_call.1} parent=1 // pred_region
      %295 = dma.done [#allocation4], 512
    $region37: #{tpu_custom_call.1} parent=1 // pred_fallthru
      _
    %296 = vsyncpa [#allocation3], 1
    %297 = vsyncpa [#allocation6], 1
    %298 = vsyncpa [#allocation4], 1

</llo_original>
